<compile_context>
chip_gen: v6e
topology: v6e:2x2x1
jax: 0.10.0
libtpu: 0.0.40
codegen_flags: <defaults>
</compile_context>

<pallas_src>
import jax
import jax.numpy as jnp
from jax import lax
from jax.experimental import pallas as pl
from jax.experimental.pallas import tpu as pltpu


def _round_up(x, m):
    return ((x + m - 1) // m) * m


def _cdiv(a, b):
    return -(-a // b)


def _vmem_budget_bytes():
    """Per-generation VMEM budget (v5e/v6e: 128 MiB physical, v7x: 64 MiB)."""
    try:
        cap = int(pltpu.get_tpu_info().vmem_capacity_bytes)
    except Exception:
        cap = 64 * 1024 * 1024
    return min((cap * 3) // 4, 96 * 1024 * 1024)


def _pick_time_block(T, cap):
    """Largest divisor of T that is <= cap (keeps T % TBLK == 0, exact recurrence)."""
    cap = int(max(1, min(cap, T)))
    for c in range(cap, 0, -1):
        if T % c == 0:
            return c
    return 1


def rnn_fused_kernel(emb_ref, wih_ref, whh_ref, b_ref, h_ref, xproj_scr, h_scr):
    """One time block of:  X_proj = emb @ W_ih + b ;  h_t = tanh(X_proj[t] + h_{t-1} @ W_hh).

    Outputs the final hidden state h_T (written on the last time-grid step).
    """
    t = pl.program_id(1)

    @pl.when(t == 0)
    def _init():
        h_scr[...] = jnp.zeros_like(h_scr)   # == init_hidden()

    tblk, tbb, ep = emb_ref.shape
    hp = h_scr.shape[-1]

    # Fused input projection for the whole time block: one big lane-dense MXU
    # matmul (bf16 operands, f32 accumulate).  (tblk, tbb, ep) -> (tblk*tbb, ep)
    # is a free sublane-major collapse because tbb % 8 == 0.
    x = emb_ref[...].reshape(tblk * tbb, ep)
    xproj_scr[...] = (jnp.dot(x, wih_ref[...], preferred_element_type=jnp.float32)
                      + b_ref[...]).reshape(tblk, tbb, hp)

    whh = whh_ref[...]
    cdt = whh.dtype

    if tbb >= 16:
        # Two independent h-carries (two batch halves) interleaved per time step:
        # chain-1's MXU push fills chain-0's matmul -> add -> tanh latency bubble.
        half = (tbb // 16) * 8
        h0 = h_scr[:half, :]
        h1 = h_scr[half:, :]
        for i in range(tblk):
            z0 = jnp.dot(h0.astype(cdt), whh, preferred_element_type=jnp.float32)
            z1 = jnp.dot(h1.astype(cdt), whh, preferred_element_type=jnp.float32)
            h0 = jnp.tanh(xproj_scr[i, :half, :] + z0)
            h1 = jnp.tanh(xproj_scr[i, half:, :] + z1)
        h_scr[:half, :] = h0
        h_scr[half:, :] = h1
    else:
        h = h_scr[...]
        for i in range(tblk):
            z = jnp.dot(h.astype(cdt), whh, preferred_element_type=jnp.float32)
            h = jnp.tanh(xproj_scr[i] + z)
        h_scr[...] = h

    @pl.when(t == pl.num_programs(1) - 1)
    def _finalize():
        # out[:, -1, :] of a unidirectional single-layer RNN == h_T.
        h_ref[...] = h_scr[...]


def rnn_forward(x_tokens, emb_table, w_ih, w_hh, b, w_fc, b_fc):
    """x_tokens: int32 [B, T]. Weights stored pre-transposed (x @ W). Returns f32 [B, O]."""
    B, T = x_tokens.shape
    V, E = emb_table.shape
    H = w_hh.shape[0]

    f32 = jnp.float32
    bf16 = jnp.bfloat16

    # Hardware-friendly padded sizes (zero padding is exact: padded hidden/emb
    # columns stay 0 through matmul/tanh, padded batch rows are sliced off).
    Ep = _round_up(E, 128)
    Hp = _round_up(H, 128)

    # Batch tiling: large tiles for MXU M-utilization; >=2 tiles whenever B
    # allows so v7x's two TensorCores both get blocks on the "parallel" axis.
    TBB_MAX = 256
    Bp0 = _round_up(B, 16)
    NB = _cdiv(Bp0, TBB_MAX)
    if NB == 1 and Bp0 >= 32:
        NB = 2
    TBB = _round_up(_cdiv(Bp0, NB), 16)
    Bp = TBB * NB

    # Per-generation VMEM budget, then size the time block to fill it:
    # double-buffered bf16 emb block + f32 xproj scratch per time step.
    vmem_budget = _vmem_budget_bytes()
    per_step = TBB * (2 * Ep * 2 + Hp * 4)
    resident = (Ep * Hp + Hp * Hp) * 2 + Hp * 4 + 2 * TBB * Hp * 4
    act_budget = max(per_step, (vmem_budget - resident) // 2)
    TBLK = _pick_time_block(T, min(32, act_budget // per_step))
    nT = T // TBLK

    emb_p = jnp.pad(emb_table, ((0, 0), (0, Ep - E))).astype(bf16)
    wih_p = jnp.pad(w_ih, ((0, Ep - E), (0, Hp - H))).astype(bf16)
    whh_p = jnp.pad(w_hh, ((0, Hp - H), (0, Hp - H))).astype(bf16)
    b_p = jnp.pad(b.astype(f32), ((0, 0), (0, Hp - H)))

    # Embedding gather in time-major order, bf16 (halves that stream's HBM traffic).
    # Padded batch rows use token 0; their results never feed real rows and are sliced off.
    # TODO(synk): gather the embedding rows inside the kernel (scalar-prefetch the
    # [T, Bp] token ids + per-row DMA) to avoid materializing emb_tm in HBM at all.
    tok_tm = jnp.pad(jnp.transpose(x_tokens), ((0, 0), (0, Bp - B)))  # [T, Bp]
    emb_tm = emb_p[tok_tm]                                            # [T, Bp, Ep] bf16

    h_last = pl.pallas_call(
        rnn_fused_kernel,
        out_shape=jax.ShapeDtypeStruct((Bp, Hp), f32),
        grid_spec=pltpu.PrefetchScalarGridSpec(
            num_scalar_prefetch=0,
            grid=(NB, nT),
            in_specs=[
                pl.BlockSpec((TBLK, TBB, Ep), lambda bb, t: (t, bb, 0)),  # emb stream
                pl.BlockSpec((Ep, Hp), lambda bb, t: (0, 0)),             # W_ih resident
                pl.BlockSpec((Hp, Hp), lambda bb, t: (0, 0)),             # W_hh resident
                pl.BlockSpec((1, Hp), lambda bb, t: (0, 0)),              # bias resident
            ],
            out_specs=pl.BlockSpec((TBB, Hp), lambda bb, t: (bb, 0)),
            scratch_shapes=[
                pltpu.VMEM((TBLK, TBB, Hp), f32),   # per-block input projection
                pltpu.VMEM((TBB, Hp), f32),         # carried hidden state
            ],
        ),
        compiler_params=pltpu.CompilerParams(
            dimension_semantics=("parallel", "arbitrary"),
            vmem_limit_bytes=int(vmem_budget)),
    )(emb_tm, wih_p, whh_p, b_p)

    # Final FC on h_T as a plain XLA matmul (O is tiny; keeps W_fc/b_fc out of VMEM).
    return h_last[:B, :H] @ w_fc + b_fc


def reference_forward(x_tokens, emb_table, w_ih, w_hh, b, w_fc, b_fc):
    emb = emb_table[x_tokens]                 # [B, T, E]
    B = emb.shape[0]
    H = w_hh.shape[0]
    h0 = jnp.zeros((B, H), jnp.float32)

    def step(h, x_t):
        h_new = jnp.tanh(x_t @ w_ih + h @ w_hh + b)
        return h_new, None

    h_last, _ = lax.scan(step, h0, jnp.transpose(emb, (1, 0, 2)))
    return h_last @ w_fc + b_fc


if __name__ == "__main__":
    # Small shapes consistent with the module's forward.
    vocab_size = 50
    emb_size = 32       # emb_size (default 300, shrunk for the test)
    hidden_size = 32    # hidden_size (default 50, shrunk for the test)
    output_size = 1
    B, T = 2, 8

    key = jax.random.PRNGKey(0)
    k_emb, k_ih, k_hh, k_bih, k_bhh, k_fcw, k_fcb, k_x = jax.random.split(key, 8)

    scale = 1.0 / jnp.sqrt(hidden_size)

    emb_table = 0.1 * jax.random.normal(k_emb, (vocab_size, emb_size),
                                        dtype=jnp.float32)
    emb_table = emb_table.at[0].set(0.0)          # padding_idx=0 -> zero row

    # Stored pre-transposed relative to PyTorch: x @ W_ih == x @ weight_ih.T
    w_ih = jax.random.uniform(k_ih, (emb_size, hidden_size),
                              minval=-scale, maxval=scale, dtype=jnp.float32)
    w_hh = jax.random.uniform(k_hh, (hidden_size, hidden_size),
                              minval=-scale, maxval=scale, dtype=jnp.float32)
    b_ih = jax.random.uniform(k_bih, (1, hidden_size),
                              minval=-scale, maxval=scale, dtype=jnp.float32)
    b_hh = jax.random.uniform(k_bhh, (1, hidden_size),
                              minval=-scale, maxval=scale, dtype=jnp.float32)
    b = b_ih + b_hh                                # combined RNN bias [1, H]

    w_fc = jax.random.uniform(k_fcw, (hidden_size, output_size),
                              minval=-scale, maxval=scale, dtype=jnp.float32)
    b_fc = jax.random.uniform(k_fcb, (1, output_size),
                              minval=-scale, maxval=scale, dtype=jnp.float32)

    x = jax.random.randint(k_x, (B, T), minval=0, maxval=vocab_size,
                           dtype=jnp.int32)

    fwd = jax.jit(rnn_forward)
    out = fwd(x, emb_table, w_ih, w_hh, b, w_fc, b_fc)
    out = jax.block_until_ready(out)

    ref = reference_forward(x, emb_table, w_ih, w_hh, b, w_fc, b_fc)
    assert out.shape == (B, output_size)
    # bf16 matmul operands (f32 accumulate / f32 tanh) -> loosened tolerance.
    assert jnp.allclose(out, ref, atol=2e-2, rtol=2e-2), (out, ref)

    print("KERNEL_OK")
</pallas_src>

<mosaic_0001>
module attributes {stable_mosaic.version = 11 : i64} {
  func.func @rnn_fused_kernel(%arg0: i32, %arg1: i32, %arg2: memref<8x16x128xbf16, #tpu.memory_space<vmem>>, %arg3: memref<128x128xbf16, #tpu.memory_space<vmem>>, %arg4: memref<128x128xbf16, #tpu.memory_space<vmem>>, %arg5: memref<1x128xf32, #tpu.memory_space<vmem>>, %arg6: memref<16x128xf32, #tpu.memory_space<vmem>>, %arg7: memref<8x16x128xf32, #tpu.memory_space<vmem>>, %arg8: memref<16x128xf32, #tpu.memory_space<vmem>>) attributes {dimension_semantics = [#tpu.dimension_semantics<parallel>, #tpu.dimension_semantics<arbitrary>], iteration_bounds = array<i64: 1, 1>, scalar_prefetch = 0 : i64, scratch_operands = 2 : i64, tpu.core_type = #tpu.core_type<tc>, window_params = [{transform_indices = @transform_0, window_bounds = array<i64: 8, 16, 128>}, {pipeline_mode = #tpu.pipeline_mode<synchronous>, transform_indices = @transform_1, window_bounds = array<i64: 128, 128>}, {pipeline_mode = #tpu.pipeline_mode<synchronous>, transform_indices = @transform_2, window_bounds = array<i64: 128, 128>}, {pipeline_mode = #tpu.pipeline_mode<synchronous>, transform_indices = @transform_3, window_bounds = array<i64: 1, 128>}, {transform_indices = @transform_4, window_bounds = array<i64: 16, 128>}]} {
    %c0_i32 = arith.constant 0 : i32
    %0 = arith.cmpi eq, %arg1, %c0_i32 : i32
    %1 = arith.extui %0 : i1 to i32
    %c0_i32_0 = arith.constant 0 : i32
    %2 = arith.cmpi ne, %1, %c0_i32_0 : i32
    scf.if %2 {
      %cst_78 = arith.constant 0.000000e+00 : f32
      %116 = vector.broadcast %cst_78 : f32 to vector<16x128xf32>
      %c0_79 = arith.constant 0 : index
      %c0_80 = arith.constant 0 : index
      %117 = vector.load %arg8[%c0_79, %c0_80] : memref<16x128xf32, #tpu.memory_space<vmem>>, vector<16x128xf32>
      tpu.vector_store %arg8[%c0_79, %c0_80], %116 {strides = array<i32>} : memref<16x128xf32, #tpu.memory_space<vmem>>, vector<16x128xf32>,
    } else {
    }
    %c0 = arith.constant 0 : index
    %c0_1 = arith.constant 0 : index
    %c0_2 = arith.constant 0 : index
    %3 = vector.load %arg2[%c0, %c0_1, %c0_2] : memref<8x16x128xbf16, #tpu.memory_space<vmem>>, vector<8x16x128xbf16>
    %4 = vector.shape_cast %3 : vector<8x16x128xbf16> to vector<128x128xbf16>
    %c0_3 = arith.constant 0 : index
    %c0_4 = arith.constant 0 : index
    %5 = vector.load %arg3[%c0_3, %c0_4] : memref<128x128xbf16, #tpu.memory_space<vmem>>, vector<128x128xbf16>
    %cst = arith.constant dense<0.000000e+00> : vector<128x128xf32>
    %6 = tpu.matmul %4, %5, %cst {dimension_numbers = #tpu.dot_dimension_numbers<[1], [0], [0], [1], [0, 0, 1, 1], [], []>} : vector<128x128xbf16>, vector<128x128xbf16>, vector<128x128xf32> -> vector<128x128xf32>
    %c0_5 = arith.constant 0 : index
    %c0_6 = arith.constant 0 : index
    %7 = vector.load %arg5[%c0_5, %c0_6] : memref<1x128xf32, #tpu.memory_space<vmem>>, vector<1x128xf32>
    %8 = vector.broadcast %7 : vector<1x128xf32> to vector<128x128xf32>
    %9 = arith.addf %6, %8 : vector<128x128xf32>
    %10 = vector.shape_cast %9 : vector<128x128xf32> to vector<8x16x128xf32>
    %c0_7 = arith.constant 0 : index
    %c0_8 = arith.constant 0 : index
    %c0_9 = arith.constant 0 : index
    %11 = vector.load %arg7[%c0_7, %c0_8, %c0_9] : memref<8x16x128xf32, #tpu.memory_space<vmem>>, vector<8x16x128xf32>
    tpu.vector_store %arg7[%c0_7, %c0_8, %c0_9], %10 {strides = array<i32>} : memref<8x16x128xf32, #tpu.memory_space<vmem>>, vector<8x16x128xf32>,
    %c0_10 = arith.constant 0 : index
    %c0_11 = arith.constant 0 : index
    %12 = vector.load %arg4[%c0_10, %c0_11] : memref<128x128xbf16, #tpu.memory_space<vmem>>, vector<128x128xbf16>
    %c0_12 = arith.constant 0 : index
    %c0_13 = arith.constant 0 : index
    %13 = vector.load %arg8[%c0_12, %c0_13] : memref<16x128xf32, #tpu.memory_space<vmem>>, vector<8x128xf32>
    %c8 = arith.constant 8 : index
    %c0_14 = arith.constant 0 : index
    %14 = vector.load %arg8[%c8, %c0_14] : memref<16x128xf32, #tpu.memory_space<vmem>>, vector<8x128xf32>
    %15 = arith.truncf %13 : vector<8x128xf32> to vector<8x128xbf16>
    %cst_15 = arith.constant dense<0.000000e+00> : vector<8x128xf32>
    %16 = tpu.matmul %15, %12, %cst_15 {dimension_numbers = #tpu.dot_dimension_numbers<[1], [0], [0], [1], [0, 0, 1, 1], [], []>} : vector<8x128xbf16>, vector<128x128xbf16>, vector<8x128xf32> -> vector<8x128xf32>
    %17 = arith.truncf %14 : vector<8x128xf32> to vector<8x128xbf16>
    %cst_16 = arith.constant dense<0.000000e+00> : vector<8x128xf32>
    %18 = tpu.matmul %17, %12, %cst_16 {dimension_numbers = #tpu.dot_dimension_numbers<[1], [0], [0], [1], [0, 0, 1, 1], [], []>} : vector<8x128xbf16>, vector<128x128xbf16>, vector<8x128xf32> -> vector<8x128xf32>
    %c0_17 = arith.constant 0 : index
    %c0_18 = arith.constant 0 : index
    %c0_19 = arith.constant 0 : index
    %19 = vector.load %arg7[%c0_17, %c0_18, %c0_19] : memref<8x16x128xf32, #tpu.memory_space<vmem>>, vector<1x8x128xf32>
    %20 = vector.shape_cast %19 : vector<1x8x128xf32> to vector<8x128xf32>
    %21 = arith.addf %20, %16 : vector<8x128xf32>
    %22 = math.tanh %21 : vector<8x128xf32>
    %c0_20 = arith.constant 0 : index
    %c8_21 = arith.constant 8 : index
    %c0_22 = arith.constant 0 : index
    %23 = vector.load %arg7[%c0_20, %c8_21, %c0_22] : memref<8x16x128xf32, #tpu.memory_space<vmem>>, vector<1x8x128xf32>
    %24 = vector.shape_cast %23 : vector<1x8x128xf32> to vector<8x128xf32>
    %25 = arith.addf %24, %18 : vector<8x128xf32>
    %26 = math.tanh %25 : vector<8x128xf32>
    %27 = arith.truncf %22 : vector<8x128xf32> to vector<8x128xbf16>
    %cst_23 = arith.constant dense<0.000000e+00> : vector<8x128xf32>
    %28 = tpu.matmul %27, %12, %cst_23 {dimension_numbers = #tpu.dot_dimension_numbers<[1], [0], [0], [1], [0, 0, 1, 1], [], []>} : vector<8x128xbf16>, vector<128x128xbf16>, vector<8x128xf32> -> vector<8x128xf32>
    %29 = arith.truncf %26 : vector<8x128xf32> to vector<8x128xbf16>
    %cst_24 = arith.constant dense<0.000000e+00> : vector<8x128xf32>
    %30 = tpu.matmul %29, %12, %cst_24 {dimension_numbers = #tpu.dot_dimension_numbers<[1], [0], [0], [1], [0, 0, 1, 1], [], []>} : vector<8x128xbf16>, vector<128x128xbf16>, vector<8x128xf32> -> vector<8x128xf32>
    %c1 = arith.constant 1 : index
    %c0_25 = arith.constant 0 : index
    %c0_26 = arith.constant 0 : index
    %31 = vector.load %arg7[%c1, %c0_25, %c0_26] : memref<8x16x128xf32, #tpu.memory_space<vmem>>, vector<1x8x128xf32>
    %32 = vector.shape_cast %31 : vector<1x8x128xf32> to vector<8x128xf32>
    %33 = arith.addf %32, %28 : vector<8x128xf32>
    %34 = math.tanh %33 : vector<8x128xf32>
    %c1_27 = arith.constant 1 : index
    %c8_28 = arith.constant 8 : index
    %c0_29 = arith.constant 0 : index
    %35 = vector.load %arg7[%c1_27, %c8_28, %c0_29] : memref<8x16x128xf32, #tpu.memory_space<vmem>>, vector<1x8x128xf32>
    %36 = vector.shape_cast %35 : vector<1x8x128xf32> to vector<8x128xf32>
    %37 = arith.addf %36, %30 : vector<8x128xf32>
    %38 = math.tanh %37 : vector<8x128xf32>
    %39 = arith.truncf %34 : vector<8x128xf32> to vector<8x128xbf16>
    %cst_30 = arith.constant dense<0.000000e+00> : vector<8x128xf32>
    %40 = tpu.matmul %39, %12, %cst_30 {dimension_numbers = #tpu.dot_dimension_numbers<[1], [0], [0], [1], [0, 0, 1, 1], [], []>} : vector<8x128xbf16>, vector<128x128xbf16>, vector<8x128xf32> -> vector<8x128xf32>
    %41 = arith.truncf %38 : vector<8x128xf32> to vector<8x128xbf16>
    %cst_31 = arith.constant dense<0.000000e+00> : vector<8x128xf32>
    %42 = tpu.matmul %41, %12, %cst_31 {dimension_numbers = #tpu.dot_dimension_numbers<[1], [0], [0], [1], [0, 0, 1, 1], [], []>} : vector<8x128xbf16>, vector<128x128xbf16>, vector<8x128xf32> -> vector<8x128xf32>
    %c2 = arith.constant 2 : index
    %c0_32 = arith.constant 0 : index
    %c0_33 = arith.constant 0 : index
    %43 = vector.load %arg7[%c2, %c0_32, %c0_33] : memref<8x16x128xf32, #tpu.memory_space<vmem>>, vector<1x8x128xf32>
    %44 = vector.shape_cast %43 : vector<1x8x128xf32> to vector<8x128xf32>
    %45 = arith.addf %44, %40 : vector<8x128xf32>
    %46 = math.tanh %45 : vector<8x128xf32>
    %c2_34 = arith.constant 2 : index
    %c8_35 = arith.constant 8 : index
    %c0_36 = arith.constant 0 : index
    %47 = vector.load %arg7[%c2_34, %c8_35, %c0_36] : memref<8x16x128xf32, #tpu.memory_space<vmem>>, vector<1x8x128xf32>
    %48 = vector.shape_cast %47 : vector<1x8x128xf32> to vector<8x128xf32>
    %49 = arith.addf %48, %42 : vector<8x128xf32>
    %50 = math.tanh %49 : vector<8x128xf32>
    %51 = arith.truncf %46 : vector<8x128xf32> to vector<8x128xbf16>
    %cst_37 = arith.constant dense<0.000000e+00> : vector<8x128xf32>
    %52 = tpu.matmul %51, %12, %cst_37 {dimension_numbers = #tpu.dot_dimension_numbers<[1], [0], [0], [1], [0, 0, 1, 1], [], []>} : vector<8x128xbf16>, vector<128x128xbf16>, vector<8x128xf32> -> vector<8x128xf32>
    %53 = arith.truncf %50 : vector<8x128xf32> to vector<8x128xbf16>
    %cst_38 = arith.constant dense<0.000000e+00> : vector<8x128xf32>
    %54 = tpu.matmul %53, %12, %cst_38 {dimension_numbers = #tpu.dot_dimension_numbers<[1], [0], [0], [1], [0, 0, 1, 1], [], []>} : vector<8x128xbf16>, vector<128x128xbf16>, vector<8x128xf32> -> vector<8x128xf32>
    %c3 = arith.constant 3 : index
    %c0_39 = arith.constant 0 : index
    %c0_40 = arith.constant 0 : index
    %55 = vector.load %arg7[%c3, %c0_39, %c0_40] : memref<8x16x128xf32, #tpu.memory_space<vmem>>, vector<1x8x128xf32>
    %56 = vector.shape_cast %55 : vector<1x8x128xf32> to vector<8x128xf32>
    %57 = arith.addf %56, %52 : vector<8x128xf32>
    %58 = math.tanh %57 : vector<8x128xf32>
    %c3_41 = arith.constant 3 : index
    %c8_42 = arith.constant 8 : index
    %c0_43 = arith.constant 0 : index
    %59 = vector.load %arg7[%c3_41, %c8_42, %c0_43] : memref<8x16x128xf32, #tpu.memory_space<vmem>>, vector<1x8x128xf32>
    %60 = vector.shape_cast %59 : vector<1x8x128xf32> to vector<8x128xf32>
    %61 = arith.addf %60, %54 : vector<8x128xf32>
    %62 = math.tanh %61 : vector<8x128xf32>
    %63 = arith.truncf %58 : vector<8x128xf32> to vector<8x128xbf16>
    %cst_44 = arith.constant dense<0.000000e+00> : vector<8x128xf32>
    %64 = tpu.matmul %63, %12, %cst_44 {dimension_numbers = #tpu.dot_dimension_numbers<[1], [0], [0], [1], [0, 0, 1, 1], [], []>} : vector<8x128xbf16>, vector<128x128xbf16>, vector<8x128xf32> -> vector<8x128xf32>
    %65 = arith.truncf %62 : vector<8x128xf32> to vector<8x128xbf16>
    %cst_45 = arith.constant dense<0.000000e+00> : vector<8x128xf32>
    %66 = tpu.matmul %65, %12, %cst_45 {dimension_numbers = #tpu.dot_dimension_numbers<[1], [0], [0], [1], [0, 0, 1, 1], [], []>} : vector<8x128xbf16>, vector<128x128xbf16>, vector<8x128xf32> -> vector<8x128xf32>
    %c4 = arith.constant 4 : index
    %c0_46 = arith.constant 0 : index
    %c0_47 = arith.constant 0 : index
    %67 = vector.load %arg7[%c4, %c0_46, %c0_47] : memref<8x16x128xf32, #tpu.memory_space<vmem>>, vector<1x8x128xf32>
    %68 = vector.shape_cast %67 : vector<1x8x128xf32> to vector<8x128xf32>
    %69 = arith.addf %68, %64 : vector<8x128xf32>
    %70 = math.tanh %69 : vector<8x128xf32>
    %c4_48 = arith.constant 4 : index
    %c8_49 = arith.constant 8 : index
    %c0_50 = arith.constant 0 : index
    %71 = vector.load %arg7[%c4_48, %c8_49, %c0_50] : memref<8x16x128xf32, #tpu.memory_space<vmem>>, vector<1x8x128xf32>
    %72 = vector.shape_cast %71 : vector<1x8x128xf32> to vector<8x128xf32>
    %73 = arith.addf %72, %66 : vector<8x128xf32>
    %74 = math.tanh %73 : vector<8x128xf32>
    %75 = arith.truncf %70 : vector<8x128xf32> to vector<8x128xbf16>
    %cst_51 = arith.constant dense<0.000000e+00> : vector<8x128xf32>
    %76 = tpu.matmul %75, %12, %cst_51 {dimension_numbers = #tpu.dot_dimension_numbers<[1], [0], [0], [1], [0, 0, 1, 1], [], []>} : vector<8x128xbf16>, vector<128x128xbf16>, vector<8x128xf32> -> vector<8x128xf32>
    %77 = arith.truncf %74 : vector<8x128xf32> to vector<8x128xbf16>
    %cst_52 = arith.constant dense<0.000000e+00> : vector<8x128xf32>
    %78 = tpu.matmul %77, %12, %cst_52 {dimension_numbers = #tpu.dot_dimension_numbers<[1], [0], [0], [1], [0, 0, 1, 1], [], []>} : vector<8x128xbf16>, vector<128x128xbf16>, vector<8x128xf32> -> vector<8x128xf32>
    %c5 = arith.constant 5 : index
    %c0_53 = arith.constant 0 : index
    %c0_54 = arith.constant 0 : index
    %79 = vector.load %arg7[%c5, %c0_53, %c0_54] : memref<8x16x128xf32, #tpu.memory_space<vmem>>, vector<1x8x128xf32>
    %80 = vector.shape_cast %79 : vector<1x8x128xf32> to vector<8x128xf32>
    %81 = arith.addf %80, %76 : vector<8x128xf32>
    %82 = math.tanh %81 : vector<8x128xf32>
    %c5_55 = arith.constant 5 : index
    %c8_56 = arith.constant 8 : index
    %c0_57 = arith.constant 0 : index
    %83 = vector.load %arg7[%c5_55, %c8_56, %c0_57] : memref<8x16x128xf32, #tpu.memory_space<vmem>>, vector<1x8x128xf32>
    %84 = vector.shape_cast %83 : vector<1x8x128xf32> to vector<8x128xf32>
    %85 = arith.addf %84, %78 : vector<8x128xf32>
    %86 = math.tanh %85 : vector<8x128xf32>
    %87 = arith.truncf %82 : vector<8x128xf32> to vector<8x128xbf16>
    %cst_58 = arith.constant dense<0.000000e+00> : vector<8x128xf32>
    %88 = tpu.matmul %87, %12, %cst_58 {dimension_numbers = #tpu.dot_dimension_numbers<[1], [0], [0], [1], [0, 0, 1, 1], [], []>} : vector<8x128xbf16>, vector<128x128xbf16>, vector<8x128xf32> -> vector<8x128xf32>
    %89 = arith.truncf %86 : vector<8x128xf32> to vector<8x128xbf16>
    %cst_59 = arith.constant dense<0.000000e+00> : vector<8x128xf32>
    %90 = tpu.matmul %89, %12, %cst_59 {dimension_numbers = #tpu.dot_dimension_numbers<[1], [0], [0], [1], [0, 0, 1, 1], [], []>} : vector<8x128xbf16>, vector<128x128xbf16>, vector<8x128xf32> -> vector<8x128xf32>
    %c6 = arith.constant 6 : index
    %c0_60 = arith.constant 0 : index
    %c0_61 = arith.constant 0 : index
    %91 = vector.load %arg7[%c6, %c0_60, %c0_61] : memref<8x16x128xf32, #tpu.memory_space<vmem>>, vector<1x8x128xf32>
    %92 = vector.shape_cast %91 : vector<1x8x128xf32> to vector<8x128xf32>
    %93 = arith.addf %92, %88 : vector<8x128xf32>
    %94 = math.tanh %93 : vector<8x128xf32>
    %c6_62 = arith.constant 6 : index
    %c8_63 = arith.constant 8 : index
    %c0_64 = arith.constant 0 : index
    %95 = vector.load %arg7[%c6_62, %c8_63, %c0_64] : memref<8x16x128xf32, #tpu.memory_space<vmem>>, vector<1x8x128xf32>
    %96 = vector.shape_cast %95 : vector<1x8x128xf32> to vector<8x128xf32>
    %97 = arith.addf %96, %90 : vector<8x128xf32>
    %98 = math.tanh %97 : vector<8x128xf32>
    %99 = arith.truncf %94 : vector<8x128xf32> to vector<8x128xbf16>
    %cst_65 = arith.constant dense<0.000000e+00> : vector<8x128xf32>
    %100 = tpu.matmul %99, %12, %cst_65 {dimension_numbers = #tpu.dot_dimension_numbers<[1], [0], [0], [1], [0, 0, 1, 1], [], []>} : vector<8x128xbf16>, vector<128x128xbf16>, vector<8x128xf32> -> vector<8x128xf32>
    %101 = arith.truncf %98 : vector<8x128xf32> to vector<8x128xbf16>
    %cst_66 = arith.constant dense<0.000000e+00> : vector<8x128xf32>
    %102 = tpu.matmul %101, %12, %cst_66 {dimension_numbers = #tpu.dot_dimension_numbers<[1], [0], [0], [1], [0, 0, 1, 1], [], []>} : vector<8x128xbf16>, vector<128x128xbf16>, vector<8x128xf32> -> vector<8x128xf32>
    %c7 = arith.constant 7 : index
    %c0_67 = arith.constant 0 : index
    %c0_68 = arith.constant 0 : index
    %103 = vector.load %arg7[%c7, %c0_67, %c0_68] : memref<8x16x128xf32, #tpu.memory_space<vmem>>, vector<1x8x128xf32>
    %104 = vector.shape_cast %103 : vector<1x8x128xf32> to vector<8x128xf32>
    %105 = arith.addf %104, %100 : vector<8x128xf32>
    %106 = math.tanh %105 : vector<8x128xf32>
    %c7_69 = arith.constant 7 : index
    %c8_70 = arith.constant 8 : index
    %c0_71 = arith.constant 0 : index
    %107 = vector.load %arg7[%c7_69, %c8_70, %c0_71] : memref<8x16x128xf32, #tpu.memory_space<vmem>>, vector<1x8x128xf32>
    %108 = vector.shape_cast %107 : vector<1x8x128xf32> to vector<8x128xf32>
    %109 = arith.addf %108, %102 : vector<8x128xf32>
    %110 = math.tanh %109 : vector<8x128xf32>
    %c0_72 = arith.constant 0 : index
    %c0_73 = arith.constant 0 : index
    %111 = vector.load %arg8[%c0_72, %c0_73] : memref<16x128xf32, #tpu.memory_space<vmem>>, vector<8x128xf32>
    tpu.vector_store %arg8[%c0_72, %c0_73], %106 {strides = array<i32>} : memref<16x128xf32, #tpu.memory_space<vmem>>, vector<8x128xf32>,
    %c8_74 = arith.constant 8 : index
    %c0_75 = arith.constant 0 : index
    %112 = vector.load %arg8[%c8_74, %c0_75] : memref<16x128xf32, #tpu.memory_space<vmem>>, vector<8x128xf32>
    tpu.vector_store %arg8[%c8_74, %c0_75], %110 {strides = array<i32>} : memref<16x128xf32, #tpu.memory_space<vmem>>, vector<8x128xf32>,
    %c0_i32_76 = arith.constant 0 : i32
    %113 = arith.cmpi eq, %arg1, %c0_i32_76 : i32
    %114 = arith.extui %113 : i1 to i32
    %c0_i32_77 = arith.constant 0 : i32
    %115 = arith.cmpi ne, %114, %c0_i32_77 : i32
    scf.if %115 {
      %c0_78 = arith.constant 0 : index
      %c0_79 = arith.constant 0 : index
      %116 = vector.load %arg8[%c0_78, %c0_79] : memref<16x128xf32, #tpu.memory_space<vmem>>, vector<16x128xf32>
      %c0_80 = arith.constant 0 : index
      %c0_81 = arith.constant 0 : index
      %117 = vector.load %arg6[%c0_80, %c0_81] : memref<16x128xf32, #tpu.memory_space<vmem>>, vector<16x128xf32>
      tpu.vector_store %arg6[%c0_80, %c0_81], %116 {strides = array<i32>} : memref<16x128xf32, #tpu.memory_space<vmem>>, vector<16x128xf32>,
    } else {
    }
    return
  }
  func.func @transform_0(%arg0: i32, %arg1: i32) -> (i32, i32, i32) {
    %c0_i32 = arith.constant 0 : i32
    %c0_i32_0 = arith.constant 0 : i32
    return %arg1, %arg0, %c0_i32 : i32, i32, i32
  }
  func.func @transform_1(%arg0: i32, %arg1: i32) -> (i32, i32) {
    %c0_i32 = arith.constant 0 : i32
    %c0_i32_0 = arith.constant 0 : i32
    %c0_i32_1 = arith.constant 0 : i32
    return %c0_i32, %c0_i32_0 : i32, i32
  }
  func.func @transform_2(%arg0: i32, %arg1: i32) -> (i32, i32) {
    %c0_i32 = arith.constant 0 : i32
    %c0_i32_0 = arith.constant 0 : i32
    %c0_i32_1 = arith.constant 0 : i32
    return %c0_i32, %c0_i32_0 : i32, i32
  }
  func.func @transform_3(%arg0: i32, %arg1: i32) -> (i32, i32) {
    %c0_i32 = arith.constant 0 : i32
    %c0_i32_0 = arith.constant 0 : i32
    %c0_i32_1 = arith.constant 0 : i32
    return %c0_i32, %c0_i32_0 : i32, i32
  }
  func.func @transform_4(%arg0: i32, %arg1: i32) -> (i32, i32) {
    %c0_i32 = arith.constant 0 : i32
    %c0_i32_0 = arith.constant 0 : i32
    return %arg0, %c0_i32 : i32, i32
  }
}

</mosaic_0001>

<llo_original>
// kernel: rnn_forward.1
$region0: #{rnn_forward.1}
  #allocation0 [shape = 'u32[]', space=smem, size = 0x4, offset = 0x4, fixed_abs, tag = 'smem constant byte address 0x4 - core index']
  #allocation1 [shape = 'u32[144,128]{1,0:T(1,128)}', space=vmem, size = 0x12000, scoped, tag = 'internal scratch']
  #allocation2 [shape = 'f32[8,16,128]{2,1,0:T(8,128)}', space=vmem, size = 0x10000, scoped, tag = 'scratch operand']
  #allocation3 [shape = 'f32[16,128]{1,0:T(8,128)}', space=vmem, size = 0x2000, scoped, tag = 'scratch operand']
  %s0 = inlined_call_operand.vmem [shape: bf16[8,16,128], index: 0, kind: input, shape index: {}]
  %s1 = inlined_call_operand.vmem [shape: bf16[128,128], index: 1, kind: input, shape index: {}]
  %s2 = inlined_call_operand.vmem [shape: bf16[128,128], index: 2, kind: input, shape index: {}]
  %s3 = inlined_call_operand.vmem [shape: f32[1,128], index: 3, kind: input, shape index: {}]
  %s4 = inlined_call_operand.vmem [shape: f32[16,128], index: 4, kind: output, shape index: {}]
  %s5 = sld [smem:[#allocation0]]
  $region34: #{rnn_forward.1} parent=0
    _
  %s7 = ssub.s32 1, %s5
  %s8 = scalar_select 0, %s7, %s5
  // Predicated region
  $region2: #{rnn_forward.1} parent=0 // pred_check
    _
  $region3: #{rnn_forward.1} parent=0 // pred_check_branch
    %10 = sbr.rel (0) target = $region5
  $region4: #{rnn_forward.1} parent=0 // pred_region
    _
  $region5: #{rnn_forward.1} parent=0 // pred_fallthru
    _
  // Predicated region
  $region6: #{rnn_forward.1} parent=0 // pred_check
    _
  $region7: #{rnn_forward.1} parent=0 // pred_check_branch
    %12 = sbr.rel (0) target = $region9
  $region8: #{rnn_forward.1} parent=0 // pred_region
    _
  $region9: #{rnn_forward.1} parent=0 // pred_fallthru
    _
  // Predicated region
  $region10: #{rnn_forward.1} parent=0 // pred_check
    _
  $region11: #{rnn_forward.1} parent=0 // pred_check_branch
    %14 = sbr.rel (0) target = $region13
  $region12: #{rnn_forward.1} parent=0 // pred_region
    _
  $region13: #{rnn_forward.1} parent=0 // pred_fallthru
    _
  // Predicated region
  $region14: #{rnn_forward.1} parent=0 // pred_check
    _
  $region15: #{rnn_forward.1} parent=0 // pred_check_branch
    %16 = sbr.rel (0) target = $region17
  $region16: #{rnn_forward.1} parent=0 // pred_region
    _
  $region17: #{rnn_forward.1} parent=0 // pred_fallthru
    _
  %p18 = scmp.eq.s32.totalorder 0, 0
  // Predicated region
  $region18: #{rnn_forward.1} parent=0 // pred_check
    %p19 = pneg %p18
  $region19: #{rnn_forward.1} parent=0 // pred_check_branch
    %21 = sbr.rel (%p19) target = $region21
  $region20: #{rnn_forward.1} parent=0 // pred_region
    %22 = vst [vmem:[#allocation3] sm:$0xff] 0.0
    %23 = vst [vmem:[#allocation3 + $0x8] sm:$0xff] 0.0
  $region21: #{rnn_forward.1} parent=0 // pred_fallthru
    _
  %v24 = vld [vmem:[%s0] sm:$0xf]
  %v25 = vld [vmem:[%s0 + $0x4] sm:$0xf]
  %v26 = vld [vmem:[%s0 + $0x8] sm:$0xf]
  %v27 = vld [vmem:[%s0 + $0xc] sm:$0xf]
  %v28 = vld [vmem:[%s0 + $0x10] sm:$0xf]
  %v29 = vld [vmem:[%s0 + $0x14] sm:$0xf]
  %v30 = vld [vmem:[%s0 + $0x18] sm:$0xf]
  %v31 = vld [vmem:[%s0 + $0x1c] sm:$0xf]
  %v32 = vld [vmem:[%s0 + $0x20] sm:$0xf]
  %v33 = vld [vmem:[%s0 + $0x24] sm:$0xf]
  %v34 = vld [vmem:[%s0 + $0x28] sm:$0xf]
  %v35 = vld [vmem:[%s0 + $0x2c] sm:$0xf]
  %v36 = vld [vmem:[%s0 + $0x30] sm:$0xf]
  %v37 = vld [vmem:[%s0 + $0x34] sm:$0xf]
  %v38 = vld [vmem:[%s0 + $0x38] sm:$0xf]
  %v39 = vld [vmem:[%s0 + $0x3c] sm:$0xf]
  %v40 = vld [vmem:[%s1] sm:$0xf]
  %v41 = vld [vmem:[%s1 + $0x4] sm:$0xf]
  %v42 = vld [vmem:[%s1 + $0x8] sm:$0xf]
  %v43 = vld [vmem:[%s1 + $0xc] sm:$0xf]
  %v44 = vld [vmem:[%s1 + $0x10] sm:$0xf]
  %v45 = vld [vmem:[%s1 + $0x14] sm:$0xf]
  %v46 = vld [vmem:[%s1 + $0x18] sm:$0xf]
  %v47 = vld [vmem:[%s1 + $0x1c] sm:$0xf]
  %v48 = vld [vmem:[%s1 + $0x20] sm:$0xf]
  %v49 = vld [vmem:[%s1 + $0x24] sm:$0xf]
  %v50 = vld [vmem:[%s1 + $0x28] sm:$0xf]
  %v51 = vld [vmem:[%s1 + $0x2c] sm:$0xf]
  %v52 = vld [vmem:[%s1 + $0x30] sm:$0xf]
  %v53 = vld [vmem:[%s1 + $0x34] sm:$0xf]
  %v54 = vld [vmem:[%s1 + $0x38] sm:$0xf]
  %v55 = vld [vmem:[%s1 + $0x3c] sm:$0xf]
  %v56 = vld [vmem:[%s3] sm:$0x1]
  %v58 = vlaneseq
  %v59 = vshrl.u32 %v58, 7
  %v60 = vsub.s32 0, %v59
  %v61 = vrot.slane %v56, %v60
  %v79 = vunpack.c.l.b16 %v24
  %v80 = vunpack.c.l.b16 %v25
  %v81 = vunpack.c.l.b16 %v26
  %v82 = vunpack.c.l.b16 %v27
  %v83 = vunpack.c.l.b16 %v28
  %v84 = vunpack.c.l.b16 %v29
  %v85 = vunpack.c.l.b16 %v30
  %v86 = vunpack.c.l.b16 %v31
  %v87 = vunpack.c.l.b16 %v32
  %v88 = vunpack.c.l.b16 %v33
  %v89 = vunpack.c.l.b16 %v34
  %v90 = vunpack.c.l.b16 %v35
  %v91 = vunpack.c.l.b16 %v36
  %v92 = vunpack.c.l.b16 %v37
  %v93 = vunpack.c.l.b16 %v38
  %v94 = vunpack.c.l.b16 %v39
  %v95 = vpack.c.b16 %v80, %v79
  %v96 = vpack.c.b16 %v82, %v81
  %v97 = vpack.c.b16 %v84, %v83
  %v98 = vpack.c.b16 %v86, %v85
  %v99 = vpack.c.b16 %v88, %v87
  %v100 = vpack.c.b16 %v90, %v89
  %v101 = vpack.c.b16 %v92, %v91
  %v102 = vpack.c.b16 %v94, %v93
  %v127 = vunpack.c.l.b16 %v40
  %v128 = vunpack.c.l.b16 %v41
  %v129 = vunpack.c.l.b16 %v42
  %v130 = vunpack.c.l.b16 %v43
  %v131 = vunpack.c.l.b16 %v44
  %v132 = vunpack.c.l.b16 %v45
  %v133 = vunpack.c.l.b16 %v46
  %v134 = vunpack.c.l.b16 %v47
  %v135 = vunpack.c.l.b16 %v48
  %v136 = vunpack.c.l.b16 %v49
  %v137 = vunpack.c.l.b16 %v50
  %v138 = vunpack.c.l.b16 %v51
  %v139 = vunpack.c.l.b16 %v52
  %v140 = vunpack.c.l.b16 %v53
  %v141 = vunpack.c.l.b16 %v54
  %v142 = vunpack.c.l.b16 %v55
  %v143 = vpack.c.b16 %v128, %v127
  %v144 = vpack.c.b16 %v130, %v129
  %v145 = vpack.c.b16 %v132, %v131
  %v146 = vpack.c.b16 %v134, %v133
  %v147 = vpack.c.b16 %v136, %v135
  %v148 = vpack.c.b16 %v138, %v137
  %v149 = vpack.c.b16 %v140, %v139
  %v150 = vpack.c.b16 %v142, %v141
  %159 = vmatprep.subr.bf16.mxu0 0
  %160 = vmatpush1.bf16.msra.mxu0 %v150
  %161 = vmatprep.subr.bf16.mxu0 0
  %162 = vmatpush1.bf16.msra.mxu0 %v149
  %163 = vmatprep.subr.bf16.mxu0 0
  %164 = vmatpush1.bf16.msra.mxu0 %v148
  %165 = vmatprep.subr.bf16.mxu0 0
  %166 = vmatpush1.bf16.msra.mxu0 %v147
  %167 = vmatprep.subr.bf16.mxu0 0
  %168 = vmatpush1.bf16.msra.mxu0 %v146
  %169 = vmatprep.subr.bf16.mxu0 0
  %170 = vmatpush1.bf16.msra.mxu0 %v145
  %171 = vmatprep.subr.bf16.mxu0 0
  %172 = vmatpush1.bf16.msra.mxu0 %v144
  %173 = vmatprep.subr.bf16.mxu0 0
  %174 = vmatpush1.bf16.msra.mxu0 %v143
  %175 = vmatprep.subr.bf16.mxu0 0
  %176 = vmatpush2.bf16.msra.mxu0 0
  %177 = vmatprep.subr.bf16.mxu0 0
  %178 = vmatpush2.bf16.msra.mxu0 0
  %179 = vmatprep.subr.bf16.mxu0 0
  %180 = vmatpush2.bf16.msra.mxu0 0
  %181 = vmatprep.subr.bf16.mxu0 0
  %182 = vmatpush2.bf16.msra.mxu0 0
  %183 = vmatprep.subr.bf16.mxu0 0
  %184 = vmatpush2.bf16.msra.mxu0 0
  %185 = vmatprep.subr.bf16.mxu0 0
  %186 = vmatpush2.bf16.msra.mxu0 0
  %187 = vmatprep.subr.bf16.mxu0 0
  %188 = vmatpush2.bf16.msra.mxu0 0
  %189 = vmatprep.subr.bf16.mxu0 0
  %190 = vmatpush2.bf16.msra.mxu0 0
  %191 = vmatprep.mubr.bf16.mxu0 0
  %192 = vmatmul.mubr.bf16.gmra.mxu0 %v95
  %v193 = vpop.f32.mrf.mxu0
  %v194 = vadd.f32 %v61, %v193
  %v195 = vpop.f32.mrf.mxu0
  %v196 = vpop.f32.mrf.mxu0
  %v197 = vadd.f32 %v61, %v196
  %v198 = vpop.f32.mrf.mxu0
  %199 = vmatprep.mubr.bf16.mxu0 0
  %200 = vmatmul.mubr.bf16.gmra.mxu0 %v96
  %v201 = vpop.f32.mrf.mxu0
  %v202 = vadd.f32 %v61, %v201
  %v203 = vpop.f32.mrf.mxu0
  %v204 = vpop.f32.mrf.mxu0
  %v205 = vadd.f32 %v61, %v204
  %v206 = vpop.f32.mrf.mxu0
  %207 = vmatprep.mubr.bf16.mxu0 0
  %208 = vmatmul.mubr.bf16.gmra.mxu0 %v97
  %v209 = vpop.f32.mrf.mxu0
  %v210 = vadd.f32 %v61, %v209
  %v211 = vpop.f32.mrf.mxu0
  %v212 = vpop.f32.mrf.mxu0
  %v213 = vadd.f32 %v61, %v212
  %v214 = vpop.f32.mrf.mxu0
  %215 = vmatprep.mubr.bf16.mxu0 0
  %216 = vmatmul.mubr.bf16.gmra.mxu0 %v98
  %v217 = vpop.f32.mrf.mxu0
  %v218 = vadd.f32 %v61, %v217
  %v219 = vpop.f32.mrf.mxu0
  %v220 = vpop.f32.mrf.mxu0
  %v221 = vadd.f32 %v61, %v220
  %v222 = vpop.f32.mrf.mxu0
  %223 = vmatprep.mubr.bf16.mxu0 0
  %224 = vmatmul.mubr.bf16.gmra.mxu0 %v99
  %v225 = vpop.f32.mrf.mxu0
  %v226 = vadd.f32 %v61, %v225
  %v227 = vpop.f32.mrf.mxu0
  %v228 = vpop.f32.mrf.mxu0
  %v229 = vadd.f32 %v61, %v228
  %v230 = vpop.f32.mrf.mxu0
  %231 = vmatprep.mubr.bf16.mxu0 0
  %232 = vmatmul.mubr.bf16.gmra.mxu0 %v100
  %v233 = vpop.f32.mrf.mxu0
  %v234 = vadd.f32 %v61, %v233
  %v235 = vpop.f32.mrf.mxu0
  %v236 = vpop.f32.mrf.mxu0
  %v237 = vadd.f32 %v61, %v236
  %v238 = vpop.f32.mrf.mxu0
  %239 = vmatprep.mubr.bf16.mxu0 0
  %240 = vmatmul.mubr.bf16.gmra.mxu0 %v101
  %v241 = vpop.f32.mrf.mxu0
  %v242 = vadd.f32 %v61, %v241
  %v243 = vpop.f32.mrf.mxu0
  %v244 = vpop.f32.mrf.mxu0
  %v245 = vadd.f32 %v61, %v244
  %v246 = vpop.f32.mrf.mxu0
  %247 = vmatprep.mubr.bf16.mxu0 0
  %248 = vmatmul.mubr.bf16.gmra.mxu0 %v102
  %v249 = vpop.f32.mrf.mxu0
  %v250 = vadd.f32 %v61, %v249
  %v251 = vpop.f32.mrf.mxu0
  %v252 = vpop.f32.mrf.mxu0
  %v253 = vadd.f32 %v61, %v252
  %v254 = vpop.f32.mrf.mxu0
  %255 = vdwg.mxu0
  %256 = vst [vmem:[#allocation2] sm:$0xff] %v194
  %257 = vst [vmem:[#allocation2 + $0x8] sm:$0xff] %v197
  %258 = vst [vmem:[#allocation2 + $0x10] sm:$0xff] %v202
  %259 = vst [vmem:[#allocation2 + $0x18] sm:$0xff] %v205
  %260 = vst [vmem:[#allocation2 + $0x20] sm:$0xff] %v210
  %261 = vst [vmem:[#allocation2 + $0x28] sm:$0xff] %v213
  %262 = vst [vmem:[#allocation2 + $0x30] sm:$0xff] %v218
  %263 = vst [vmem:[#allocation2 + $0x38] sm:$0xff] %v221
  %264 = vst [vmem:[#allocation2 + $0x40] sm:$0xff] %v226
  %265 = vst [vmem:[#allocation2 + $0x48] sm:$0xff] %v229
  %266 = vst [vmem:[#allocation2 + $0x50] sm:$0xff] %v234
  %267 = vst [vmem:[#allocation2 + $0x58] sm:$0xff] %v237
  %268 = vst [vmem:[#allocation2 + $0x60] sm:$0xff] %v242
  %269 = vst [vmem:[#allocation2 + $0x68] sm:$0xff] %v245
  %270 = vst [vmem:[#allocation2 + $0x70] sm:$0xff] %v250
  %271 = vst [vmem:[#allocation2 + $0x78] sm:$0xff] %v253
  %v272 = vld [vmem:[%s2] sm:$0xf]
  %v273 = vld [vmem:[%s2 + $0x4] sm:$0xf]
  %v274 = vld [vmem:[%s2 + $0x8] sm:$0xf]
  %v275 = vld [vmem:[%s2 + $0xc] sm:$0xf]
  %v276 = vld [vmem:[%s2 + $0x10] sm:$0xf]
  %v277 = vld [vmem:[%s2 + $0x14] sm:$0xf]
  %v278 = vld [vmem:[%s2 + $0x18] sm:$0xf]
  %v279 = vld [vmem:[%s2 + $0x1c] sm:$0xf]
  %v280 = vld [vmem:[%s2 + $0x20] sm:$0xf]
  %v281 = vld [vmem:[%s2 + $0x24] sm:$0xf]
  %v282 = vld [vmem:[%s2 + $0x28] sm:$0xf]
  %v283 = vld [vmem:[%s2 + $0x2c] sm:$0xf]
  %v284 = vld [vmem:[%s2 + $0x30] sm:$0xf]
  %v285 = vld [vmem:[%s2 + $0x34] sm:$0xf]
  %v286 = vld [vmem:[%s2 + $0x38] sm:$0xf]
  %v287 = vld [vmem:[%s2 + $0x3c] sm:$0xf]
  %v288 = vld [vmem:[#allocation3] sm:$0xff]
  %v289 = vld [vmem:[#allocation3 + $0x8] sm:$0xff]
  %v290 = vpack.c.bf16 %v288, %v288
  %v307 = vunpack.c.l.b16 %v272
  %v308 = vunpack.c.l.b16 %v273
  %v309 = vunpack.c.l.b16 %v274
  %v310 = vunpack.c.l.b16 %v275
  %v311 = vunpack.c.l.b16 %v276
  %v312 = vunpack.c.l.b16 %v277
  %v313 = vunpack.c.l.b16 %v278
  %v314 = vunpack.c.l.b16 %v279
  %v315 = vunpack.c.l.b16 %v280
  %v316 = vunpack.c.l.b16 %v281
  %v317 = vunpack.c.l.b16 %v282
  %v318 = vunpack.c.l.b16 %v283
  %v319 = vunpack.c.l.b16 %v284
  %v320 = vunpack.c.l.b16 %v285
  %v321 = vunpack.c.l.b16 %v286
  %v322 = vunpack.c.l.b16 %v287
  %v323 = vpack.c.b16 %v308, %v307
  %v324 = vpack.c.b16 %v310, %v309
  %v325 = vpack.c.b16 %v312, %v311
  %v326 = vpack.c.b16 %v314, %v313
  %v327 = vpack.c.b16 %v316, %v315
  %v328 = vpack.c.b16 %v318, %v317
  %v329 = vpack.c.b16 %v320, %v319
  %v330 = vpack.c.b16 %v322, %v321
  %339 = vmatprep.subr.bf16.mxu0 0
  %340 = vmatpush1.bf16.msra.mxu0 %v330
  %341 = vmatprep.subr.bf16.mxu0 0
  %342 = vmatpush1.bf16.msra.mxu0 %v329
  %343 = vmatprep.subr.bf16.mxu0 0
  %344 = vmatpush1.bf16.msra.mxu0 %v328
  %345 = vmatprep.subr.bf16.mxu0 0
  %346 = vmatpush1.bf16.msra.mxu0 %v327
  %347 = vmatprep.subr.bf16.mxu0 0
  %348 = vmatpush1.bf16.msra.mxu0 %v326
  %349 = vmatprep.subr.bf16.mxu0 0
  %350 = vmatpush1.bf16.msra.mxu0 %v325
  %351 = vmatprep.subr.bf16.mxu0 0
  %352 = vmatpush1.bf16.msra.mxu0 %v324
  %353 = vmatprep.subr.bf16.mxu0 0
  %354 = vmatpush1.bf16.msra.mxu0 %v323
  %355 = vmatprep.subr.bf16.mxu0 0
  %356 = vmatpush2.bf16.msra.mxu0 0
  %357 = vmatprep.subr.bf16.mxu0 0
  %358 = vmatpush2.bf16.msra.mxu0 0
  %359 = vmatprep.subr.bf16.mxu0 0
  %360 = vmatpush2.bf16.msra.mxu0 0
  %361 = vmatprep.subr.bf16.mxu0 0
  %362 = vmatpush2.bf16.msra.mxu0 0
  %363 = vmatprep.subr.bf16.mxu0 0
  %364 = vmatpush2.bf16.msra.mxu0 0
  %365 = vmatprep.subr.bf16.mxu0 0
  %366 = vmatpush2.bf16.msra.mxu0 0
  %367 = vmatprep.subr.bf16.mxu0 0
  %368 = vmatpush2.bf16.msra.mxu0 0
  %369 = vmatprep.subr.bf16.mxu0 0
  %370 = vmatpush2.bf16.msra.mxu0 0
  %371 = vmatprep.mubr.bf16.mxu0 0
  %372 = vmatmul.mubr.bf16.gmra.mxu0 %v290
  %v373 = vpop.f32.mrf.mxu0
  %v374 = vadd.f32 0.0, %v373
  %v375 = vpop.f32.mrf.mxu0
  %v376 = vpop.f32.mrf.mxu0
  %v377 = vpop.f32.mrf.mxu0
  %378 = vdwg.mxu0
  %v379 = vpack.c.bf16 %v289, %v289
  %380 = vmatprep.subr.bf16.mxu0 0
  %381 = vmatpush1.bf16.msra.mxu0 %v330
  %382 = vmatprep.subr.bf16.mxu0 0
  %383 = vmatpush1.bf16.msra.mxu0 %v329
  %384 = vmatprep.subr.bf16.mxu0 0
  %385 = vmatpush1.bf16.msra.mxu0 %v328
  %386 = vmatprep.subr.bf16.mxu0 0
  %387 = vmatpush1.bf16.msra.mxu0 %v327
  %388 = vmatprep.subr.bf16.mxu0 0
  %389 = vmatpush1.bf16.msra.mxu0 %v326
  %390 = vmatprep.subr.bf16.mxu0 0
  %391 = vmatpush1.bf16.msra.mxu0 %v325
  %392 = vmatprep.subr.bf16.mxu0 0
  %393 = vmatpush1.bf16.msra.mxu0 %v324
  %394 = vmatprep.subr.bf16.mxu0 0
  %395 = vmatpush1.bf16.msra.mxu0 %v323
  %396 = vmatprep.subr.bf16.mxu0 0
  %397 = vmatpush2.bf16.msra.mxu0 0
  %398 = vmatprep.subr.bf16.mxu0 0
  %399 = vmatpush2.bf16.msra.mxu0 0
  %400 = vmatprep.subr.bf16.mxu0 0
  %401 = vmatpush2.bf16.msra.mxu0 0
  %402 = vmatprep.subr.bf16.mxu0 0
  %403 = vmatpush2.bf16.msra.mxu0 0
  %404 = vmatprep.subr.bf16.mxu0 0
  %405 = vmatpush2.bf16.msra.mxu0 0
  %406 = vmatprep.subr.bf16.mxu0 0
  %407 = vmatpush2.bf16.msra.mxu0 0
  %408 = vmatprep.subr.bf16.mxu0 0
  %409 = vmatpush2.bf16.msra.mxu0 0
  %410 = vmatprep.subr.bf16.mxu0 0
  %411 = vmatpush2.bf16.msra.mxu0 0
  %412 = vmatprep.mubr.bf16.mxu0 0
  %413 = vmatmul.mubr.bf16.gmra.mxu0 %v379
  %v414 = vpop.f32.mrf.mxu0
  %v415 = vadd.f32 0.0, %v414
  %v416 = vpop.f32.mrf.mxu0
  %v417 = vpop.f32.mrf.mxu0
  %v418 = vpop.f32.mrf.mxu0
  %419 = vdwg.mxu0
  %v420 = vld [vmem:[#allocation2] sm:$0xff]
  %v421 = vadd.f32 %v420, %v374
  %v422 = vtanh.pop %v421
  %v423 = vld [vmem:[#allocation2 + $0x8] sm:$0xff]
  %v424 = vadd.f32 %v423, %v415
  %v425 = vtanh.pop %v424
  %v426 = vpack.c.bf16 %v422, %v422
  %427 = vmatprep.subr.bf16.mxu0 0
  %428 = vmatpush1.bf16.msra.mxu0 %v330
  %429 = vmatprep.subr.bf16.mxu0 0
  %430 = vmatpush1.bf16.msra.mxu0 %v329
  %431 = vmatprep.subr.bf16.mxu0 0
  %432 = vmatpush1.bf16.msra.mxu0 %v328
  %433 = vmatprep.subr.bf16.mxu0 0
  %434 = vmatpush1.bf16.msra.mxu0 %v327
  %435 = vmatprep.subr.bf16.mxu0 0
  %436 = vmatpush1.bf16.msra.mxu0 %v326
  %437 = vmatprep.subr.bf16.mxu0 0
  %438 = vmatpush1.bf16.msra.mxu0 %v325
  %439 = vmatprep.subr.bf16.mxu0 0
  %440 = vmatpush1.bf16.msra.mxu0 %v324
  %441 = vmatprep.subr.bf16.mxu0 0
  %442 = vmatpush1.bf16.msra.mxu0 %v323
  %443 = vmatprep.subr.bf16.mxu0 0
  %444 = vmatpush2.bf16.msra.mxu0 0
  %445 = vmatprep.subr.bf16.mxu0 0
  %446 = vmatpush2.bf16.msra.mxu0 0
  %447 = vmatprep.subr.bf16.mxu0 0
  %448 = vmatpush2.bf16.msra.mxu0 0
  %449 = vmatprep.subr.bf16.mxu0 0
  %450 = vmatpush2.bf16.msra.mxu0 0
  %451 = vmatprep.subr.bf16.mxu0 0
  %452 = vmatpush2.bf16.msra.mxu0 0
  %453 = vmatprep.subr.bf16.mxu0 0
  %454 = vmatpush2.bf16.msra.mxu0 0
  %455 = vmatprep.subr.bf16.mxu0 0
  %456 = vmatpush2.bf16.msra.mxu0 0
  %457 = vmatprep.subr.bf16.mxu0 0
  %458 = vmatpush2.bf16.msra.mxu0 0
  %459 = vmatprep.mubr.bf16.mxu0 0
  %460 = vmatmul.mubr.bf16.gmra.mxu0 %v426
  %v461 = vpop.f32.mrf.mxu0
  %v462 = vadd.f32 0.0, %v461
  %v463 = vpop.f32.mrf.mxu0
  %v464 = vpop.f32.mrf.mxu0
  %v465 = vpop.f32.mrf.mxu0
  %466 = vdwg.mxu0
  %v467 = vpack.c.bf16 %v425, %v425
  %468 = vmatprep.subr.bf16.mxu0 0
  %469 = vmatpush1.bf16.msra.mxu0 %v330
  %470 = vmatprep.subr.bf16.mxu0 0
  %471 = vmatpush1.bf16.msra.mxu0 %v329
  %472 = vmatprep.subr.bf16.mxu0 0
  %473 = vmatpush1.bf16.msra.mxu0 %v328
  %474 = vmatprep.subr.bf16.mxu0 0
  %475 = vmatpush1.bf16.msra.mxu0 %v327
  %476 = vmatprep.subr.bf16.mxu0 0
  %477 = vmatpush1.bf16.msra.mxu0 %v326
  %478 = vmatprep.subr.bf16.mxu0 0
  %479 = vmatpush1.bf16.msra.mxu0 %v325
  %480 = vmatprep.subr.bf16.mxu0 0
  %481 = vmatpush1.bf16.msra.mxu0 %v324
  %482 = vmatprep.subr.bf16.mxu0 0
  %483 = vmatpush1.bf16.msra.mxu0 %v323
  %484 = vmatprep.subr.bf16.mxu0 0
  %485 = vmatpush2.bf16.msra.mxu0 0
  %486 = vmatprep.subr.bf16.mxu0 0
  %487 = vmatpush2.bf16.msra.mxu0 0
  %488 = vmatprep.subr.bf16.mxu0 0
  %489 = vmatpush2.bf16.msra.mxu0 0
  %490 = vmatprep.subr.bf16.mxu0 0
  %491 = vmatpush2.bf16.msra.mxu0 0
  %492 = vmatprep.subr.bf16.mxu0 0
  %493 = vmatpush2.bf16.msra.mxu0 0
  %494 = vmatprep.subr.bf16.mxu0 0
  %495 = vmatpush2.bf16.msra.mxu0 0
  %496 = vmatprep.subr.bf16.mxu0 0
  %497 = vmatpush2.bf16.msra.mxu0 0
  %498 = vmatprep.subr.bf16.mxu0 0
  %499 = vmatpush2.bf16.msra.mxu0 0
  %500 = vmatprep.mubr.bf16.mxu0 0
  %501 = vmatmul.mubr.bf16.gmra.mxu0 %v467
  %v502 = vpop.f32.mrf.mxu0
  %v503 = vadd.f32 0.0, %v502
  %v504 = vpop.f32.mrf.mxu0
  %v505 = vpop.f32.mrf.mxu0
  %v506 = vpop.f32.mrf.mxu0
  %507 = vdwg.mxu0
  %s508 = scalar_lea.vmem [#allocation2], 16
  %v509 = vld [vmem:[%s508] sm:$0xff]
  %v510 = vadd.f32 %v509, %v462
  %v511 = vtanh.pop %v510
  %v512 = vld [vmem:[%s508 + $0x8] sm:$0xff]
  %v513 = vadd.f32 %v512, %v503
  %v514 = vtanh.pop %v513
  %v515 = vpack.c.bf16 %v511, %v511
  %516 = vmatprep.subr.bf16.mxu0 0
  %517 = vmatpush1.bf16.msra.mxu0 %v330
  %518 = vmatprep.subr.bf16.mxu0 0
  %519 = vmatpush1.bf16.msra.mxu0 %v329
  %520 = vmatprep.subr.bf16.mxu0 0
  %521 = vmatpush1.bf16.msra.mxu0 %v328
  %522 = vmatprep.subr.bf16.mxu0 0
  %523 = vmatpush1.bf16.msra.mxu0 %v327
  %524 = vmatprep.subr.bf16.mxu0 0
  %525 = vmatpush1.bf16.msra.mxu0 %v326
  %526 = vmatprep.subr.bf16.mxu0 0
  %527 = vmatpush1.bf16.msra.mxu0 %v325
  %528 = vmatprep.subr.bf16.mxu0 0
  %529 = vmatpush1.bf16.msra.mxu0 %v324
  %530 = vmatprep.subr.bf16.mxu0 0
  %531 = vmatpush1.bf16.msra.mxu0 %v323
  %532 = vmatprep.subr.bf16.mxu0 0
  %533 = vmatpush2.bf16.msra.mxu0 0
  %534 = vmatprep.subr.bf16.mxu0 0
  %535 = vmatpush2.bf16.msra.mxu0 0
  %536 = vmatprep.subr.bf16.mxu0 0
  %537 = vmatpush2.bf16.msra.mxu0 0
  %538 = vmatprep.subr.bf16.mxu0 0
  %539 = vmatpush2.bf16.msra.mxu0 0
  %540 = vmatprep.subr.bf16.mxu0 0
  %541 = vmatpush2.bf16.msra.mxu0 0
  %542 = vmatprep.subr.bf16.mxu0 0
  %543 = vmatpush2.bf16.msra.mxu0 0
  %544 = vmatprep.subr.bf16.mxu0 0
  %545 = vmatpush2.bf16.msra.mxu0 0
  %546 = vmatprep.subr.bf16.mxu0 0
  %547 = vmatpush2.bf16.msra.mxu0 0
  %548 = vmatprep.mubr.bf16.mxu0 0
  %549 = vmatmul.mubr.bf16.gmra.mxu0 %v515
  %v550 = vpop.f32.mrf.mxu0
  %v551 = vadd.f32 0.0, %v550
  %v552 = vpop.f32.mrf.mxu0
  %v553 = vpop.f32.mrf.mxu0
  %v554 = vpop.f32.mrf.mxu0
  %555 = vdwg.mxu0
  %v556 = vpack.c.bf16 %v514, %v514
  %557 = vmatprep.subr.bf16.mxu0 0
  %558 = vmatpush1.bf16.msra.mxu0 %v330
  %559 = vmatprep.subr.bf16.mxu0 0
  %560 = vmatpush1.bf16.msra.mxu0 %v329
  %561 = vmatprep.subr.bf16.mxu0 0
  %562 = vmatpush1.bf16.msra.mxu0 %v328
  %563 = vmatprep.subr.bf16.mxu0 0
  %564 = vmatpush1.bf16.msra.mxu0 %v327
  %565 = vmatprep.subr.bf16.mxu0 0
  %566 = vmatpush1.bf16.msra.mxu0 %v326
  %567 = vmatprep.subr.bf16.mxu0 0
  %568 = vmatpush1.bf16.msra.mxu0 %v325
  %569 = vmatprep.subr.bf16.mxu0 0
  %570 = vmatpush1.bf16.msra.mxu0 %v324
  %571 = vmatprep.subr.bf16.mxu0 0
  %572 = vmatpush1.bf16.msra.mxu0 %v323
  %573 = vmatprep.subr.bf16.mxu0 0
  %574 = vmatpush2.bf16.msra.mxu0 0
  %575 = vmatprep.subr.bf16.mxu0 0
  %576 = vmatpush2.bf16.msra.mxu0 0
  %577 = vmatprep.subr.bf16.mxu0 0
  %578 = vmatpush2.bf16.msra.mxu0 0
  %579 = vmatprep.subr.bf16.mxu0 0
  %580 = vmatpush2.bf16.msra.mxu0 0
  %581 = vmatprep.subr.bf16.mxu0 0
  %582 = vmatpush2.bf16.msra.mxu0 0
  %583 = vmatprep.subr.bf16.mxu0 0
  %584 = vmatpush2.bf16.msra.mxu0 0
  %585 = vmatprep.subr.bf16.mxu0 0
  %586 = vmatpush2.bf16.msra.mxu0 0
  %587 = vmatprep.subr.bf16.mxu0 0
  %588 = vmatpush2.bf16.msra.mxu0 0
  %589 = vmatprep.mubr.bf16.mxu0 0
  %590 = vmatmul.mubr.bf16.gmra.mxu0 %v556
  %v591 = vpop.f32.mrf.mxu0
  %v592 = vadd.f32 0.0, %v591
  %v593 = vpop.f32.mrf.mxu0
  %v594 = vpop.f32.mrf.mxu0
  %v595 = vpop.f32.mrf.mxu0
  %596 = vdwg.mxu0
  %s597 = scalar_lea.vmem [#allocation2], 32
  %v598 = vld [vmem:[%s597] sm:$0xff]
  %v599 = vadd.f32 %v598, %v551
  %v600 = vtanh.pop %v599
  %v601 = vld [vmem:[%s597 + $0x8] sm:$0xff]
  %v602 = vadd.f32 %v601, %v592
  %v603 = vtanh.pop %v602
  %v604 = vpack.c.bf16 %v600, %v600
  %605 = vmatprep.subr.bf16.mxu0 0
  %606 = vmatpush1.bf16.msra.mxu0 %v330
  %607 = vmatprep.subr.bf16.mxu0 0
  %608 = vmatpush1.bf16.msra.mxu0 %v329
  %609 = vmatprep.subr.bf16.mxu0 0
  %610 = vmatpush1.bf16.msra.mxu0 %v328
  %611 = vmatprep.subr.bf16.mxu0 0
  %612 = vmatpush1.bf16.msra.mxu0 %v327
  %613 = vmatprep.subr.bf16.mxu0 0
  %614 = vmatpush1.bf16.msra.mxu0 %v326
  %615 = vmatprep.subr.bf16.mxu0 0
  %616 = vmatpush1.bf16.msra.mxu0 %v325
  %617 = vmatprep.subr.bf16.mxu0 0
  %618 = vmatpush1.bf16.msra.mxu0 %v324
  %619 = vmatprep.subr.bf16.mxu0 0
  %620 = vmatpush1.bf16.msra.mxu0 %v323
  %621 = vmatprep.subr.bf16.mxu0 0
  %622 = vmatpush2.bf16.msra.mxu0 0
  %623 = vmatprep.subr.bf16.mxu0 0
  %624 = vmatpush2.bf16.msra.mxu0 0
  %625 = vmatprep.subr.bf16.mxu0 0
  %626 = vmatpush2.bf16.msra.mxu0 0
  %627 = vmatprep.subr.bf16.mxu0 0
  %628 = vmatpush2.bf16.msra.mxu0 0
  %629 = vmatprep.subr.bf16.mxu0 0
  %630 = vmatpush2.bf16.msra.mxu0 0
  %631 = vmatprep.subr.bf16.mxu0 0
  %632 = vmatpush2.bf16.msra.mxu0 0
  %633 = vmatprep.subr.bf16.mxu0 0
  %634 = vmatpush2.bf16.msra.mxu0 0
  %635 = vmatprep.subr.bf16.mxu0 0
  %636 = vmatpush2.bf16.msra.mxu0 0
  %637 = vmatprep.mubr.bf16.mxu0 0
  %638 = vmatmul.mubr.bf16.gmra.mxu0 %v604
  %v639 = vpop.f32.mrf.mxu0
  %v640 = vadd.f32 0.0, %v639
  %v641 = vpop.f32.mrf.mxu0
  %v642 = vpop.f32.mrf.mxu0
  %v643 = vpop.f32.mrf.mxu0
  %644 = vdwg.mxu0
  %v645 = vpack.c.bf16 %v603, %v603
  %646 = vmatprep.subr.bf16.mxu0 0
  %647 = vmatpush1.bf16.msra.mxu0 %v330
  %648 = vmatprep.subr.bf16.mxu0 0
  %649 = vmatpush1.bf16.msra.mxu0 %v329
  %650 = vmatprep.subr.bf16.mxu0 0
  %651 = vmatpush1.bf16.msra.mxu0 %v328
  %652 = vmatprep.subr.bf16.mxu0 0
  %653 = vmatpush1.bf16.msra.mxu0 %v327
  %654 = vmatprep.subr.bf16.mxu0 0
  %655 = vmatpush1.bf16.msra.mxu0 %v326
  %656 = vmatprep.subr.bf16.mxu0 0
  %657 = vmatpush1.bf16.msra.mxu0 %v325
  %658 = vmatprep.subr.bf16.mxu0 0
  %659 = vmatpush1.bf16.msra.mxu0 %v324
  %660 = vmatprep.subr.bf16.mxu0 0
  %661 = vmatpush1.bf16.msra.mxu0 %v323
  %662 = vmatprep.subr.bf16.mxu0 0
  %663 = vmatpush2.bf16.msra.mxu0 0
  %664 = vmatprep.subr.bf16.mxu0 0
  %665 = vmatpush2.bf16.msra.mxu0 0
  %666 = vmatprep.subr.bf16.mxu0 0
  %667 = vmatpush2.bf16.msra.mxu0 0
  %668 = vmatprep.subr.bf16.mxu0 0
  %669 = vmatpush2.bf16.msra.mxu0 0
  %670 = vmatprep.subr.bf16.mxu0 0
  %671 = vmatpush2.bf16.msra.mxu0 0
  %672 = vmatprep.subr.bf16.mxu0 0
  %673 = vmatpush2.bf16.msra.mxu0 0
  %674 = vmatprep.subr.bf16.mxu0 0
  %675 = vmatpush2.bf16.msra.mxu0 0
  %676 = vmatprep.subr.bf16.mxu0 0
  %677 = vmatpush2.bf16.msra.mxu0 0
  %678 = vmatprep.mubr.bf16.mxu0 0
  %679 = vmatmul.mubr.bf16.gmra.mxu0 %v645
  %v680 = vpop.f32.mrf.mxu0
  %v681 = vadd.f32 0.0, %v680
  %v682 = vpop.f32.mrf.mxu0
  %v683 = vpop.f32.mrf.mxu0
  %v684 = vpop.f32.mrf.mxu0
  %685 = vdwg.mxu0
  %s686 = scalar_lea.vmem [#allocation2], 48
  %v687 = vld [vmem:[%s686] sm:$0xff]
  %v688 = vadd.f32 %v687, %v640
  %v689 = vtanh.pop %v688
  %v690 = vld [vmem:[%s686 + $0x8] sm:$0xff]
  %v691 = vadd.f32 %v690, %v681
  %v692 = vtanh.pop %v691
  %v693 = vpack.c.bf16 %v689, %v689
  %694 = vmatprep.subr.bf16.mxu0 0
  %695 = vmatpush1.bf16.msra.mxu0 %v330
  %696 = vmatprep.subr.bf16.mxu0 0
  %697 = vmatpush1.bf16.msra.mxu0 %v329
  %698 = vmatprep.subr.bf16.mxu0 0
  %699 = vmatpush1.bf16.msra.mxu0 %v328
  %700 = vmatprep.subr.bf16.mxu0 0
  %701 = vmatpush1.bf16.msra.mxu0 %v327
  %702 = vmatprep.subr.bf16.mxu0 0
  %703 = vmatpush1.bf16.msra.mxu0 %v326
  %704 = vmatprep.subr.bf16.mxu0 0
  %705 = vmatpush1.bf16.msra.mxu0 %v325
  %706 = vmatprep.subr.bf16.mxu0 0
  %707 = vmatpush1.bf16.msra.mxu0 %v324
  %708 = vmatprep.subr.bf16.mxu0 0
  %709 = vmatpush1.bf16.msra.mxu0 %v323
  %710 = vmatprep.subr.bf16.mxu0 0
  %711 = vmatpush2.bf16.msra.mxu0 0
  %712 = vmatprep.subr.bf16.mxu0 0
  %713 = vmatpush2.bf16.msra.mxu0 0
  %714 = vmatprep.subr.bf16.mxu0 0
  %715 = vmatpush2.bf16.msra.mxu0 0
  %716 = vmatprep.subr.bf16.mxu0 0
  %717 = vmatpush2.bf16.msra.mxu0 0
  %718 = vmatprep.subr.bf16.mxu0 0
  %719 = vmatpush2.bf16.msra.mxu0 0
  %720 = vmatprep.subr.bf16.mxu0 0
  %721 = vmatpush2.bf16.msra.mxu0 0
  %722 = vmatprep.subr.bf16.mxu0 0
  %723 = vmatpush2.bf16.msra.mxu0 0
  %724 = vmatprep.subr.bf16.mxu0 0
  %725 = vmatpush2.bf16.msra.mxu0 0
  %726 = vmatprep.mubr.bf16.mxu0 0
  %727 = vmatmul.mubr.bf16.gmra.mxu0 %v693
  %v728 = vpop.f32.mrf.mxu0
  %v729 = vadd.f32 0.0, %v728
  %v730 = vpop.f32.mrf.mxu0
  %v731 = vpop.f32.mrf.mxu0
  %v732 = vpop.f32.mrf.mxu0
  %733 = vdwg.mxu0
  %v734 = vpack.c.bf16 %v692, %v692
  %735 = vmatprep.subr.bf16.mxu0 0
  %736 = vmatpush1.bf16.msra.mxu0 %v330
  %737 = vmatprep.subr.bf16.mxu0 0
  %738 = vmatpush1.bf16.msra.mxu0 %v329
  %739 = vmatprep.subr.bf16.mxu0 0
  %740 = vmatpush1.bf16.msra.mxu0 %v328
  %741 = vmatprep.subr.bf16.mxu0 0
  %742 = vmatpush1.bf16.msra.mxu0 %v327
  %743 = vmatprep.subr.bf16.mxu0 0
  %744 = vmatpush1.bf16.msra.mxu0 %v326
  %745 = vmatprep.subr.bf16.mxu0 0
  %746 = vmatpush1.bf16.msra.mxu0 %v325
  %747 = vmatprep.subr.bf16.mxu0 0
  %748 = vmatpush1.bf16.msra.mxu0 %v324
  %749 = vmatprep.subr.bf16.mxu0 0
  %750 = vmatpush1.bf16.msra.mxu0 %v323
  %751 = vmatprep.subr.bf16.mxu0 0
  %752 = vmatpush2.bf16.msra.mxu0 0
  %753 = vmatprep.subr.bf16.mxu0 0
  %754 = vmatpush2.bf16.msra.mxu0 0
  %755 = vmatprep.subr.bf16.mxu0 0
  %756 = vmatpush2.bf16.msra.mxu0 0
  %757 = vmatprep.subr.bf16.mxu0 0
  %758 = vmatpush2.bf16.msra.mxu0 0
  %759 = vmatprep.subr.bf16.mxu0 0
  %760 = vmatpush2.bf16.msra.mxu0 0
  %761 = vmatprep.subr.bf16.mxu0 0
  %762 = vmatpush2.bf16.msra.mxu0 0
  %763 = vmatprep.subr.bf16.mxu0 0
  %764 = vmatpush2.bf16.msra.mxu0 0
  %765 = vmatprep.subr.bf16.mxu0 0
  %766 = vmatpush2.bf16.msra.mxu0 0
  %767 = vmatprep.mubr.bf16.mxu0 0
  %768 = vmatmul.mubr.bf16.gmra.mxu0 %v734
  %v769 = vpop.f32.mrf.mxu0
  %v770 = vadd.f32 0.0, %v769
  %v771 = vpop.f32.mrf.mxu0
  %v772 = vpop.f32.mrf.mxu0
  %v773 = vpop.f32.mrf.mxu0
  %774 = vdwg.mxu0
  %s775 = scalar_lea.vmem [#allocation2], 64
  %v776 = vld [vmem:[%s775] sm:$0xff]
  %v777 = vadd.f32 %v776, %v729
  %v778 = vtanh.pop %v777
  %v779 = vld [vmem:[%s775 + $0x8] sm:$0xff]
  %v780 = vadd.f32 %v779, %v770
  %v781 = vtanh.pop %v780
  %v782 = vpack.c.bf16 %v778, %v778
  %783 = vmatprep.subr.bf16.mxu0 0
  %784 = vmatpush1.bf16.msra.mxu0 %v330
  %785 = vmatprep.subr.bf16.mxu0 0
  %786 = vmatpush1.bf16.msra.mxu0 %v329
  %787 = vmatprep.subr.bf16.mxu0 0
  %788 = vmatpush1.bf16.msra.mxu0 %v328
  %789 = vmatprep.subr.bf16.mxu0 0
  %790 = vmatpush1.bf16.msra.mxu0 %v327
  %791 = vmatprep.subr.bf16.mxu0 0
  %792 = vmatpush1.bf16.msra.mxu0 %v326
  %793 = vmatprep.subr.bf16.mxu0 0
  %794 = vmatpush1.bf16.msra.mxu0 %v325
  %795 = vmatprep.subr.bf16.mxu0 0
  %796 = vmatpush1.bf16.msra.mxu0 %v324
  %797 = vmatprep.subr.bf16.mxu0 0
  %798 = vmatpush1.bf16.msra.mxu0 %v323
  %799 = vmatprep.subr.bf16.mxu0 0
  %800 = vmatpush2.bf16.msra.mxu0 0
  %801 = vmatprep.subr.bf16.mxu0 0
  %802 = vmatpush2.bf16.msra.mxu0 0
  %803 = vmatprep.subr.bf16.mxu0 0
  %804 = vmatpush2.bf16.msra.mxu0 0
  %805 = vmatprep.subr.bf16.mxu0 0
  %806 = vmatpush2.bf16.msra.mxu0 0
  %807 = vmatprep.subr.bf16.mxu0 0
  %808 = vmatpush2.bf16.msra.mxu0 0
  %809 = vmatprep.subr.bf16.mxu0 0
  %810 = vmatpush2.bf16.msra.mxu0 0
  %811 = vmatprep.subr.bf16.mxu0 0
  %812 = vmatpush2.bf16.msra.mxu0 0
  %813 = vmatprep.subr.bf16.mxu0 0
  %814 = vmatpush2.bf16.msra.mxu0 0
  %815 = vmatprep.mubr.bf16.mxu0 0
  %816 = vmatmul.mubr.bf16.gmra.mxu0 %v782
  %v817 = vpop.f32.mrf.mxu0
  %v818 = vadd.f32 0.0, %v817
  %v819 = vpop.f32.mrf.mxu0
  %v820 = vpop.f32.mrf.mxu0
  %v821 = vpop.f32.mrf.mxu0
  %822 = vdwg.mxu0
  %v823 = vpack.c.bf16 %v781, %v781
  %824 = vmatprep.subr.bf16.mxu0 0
  %825 = vmatpush1.bf16.msra.mxu0 %v330
  %826 = vmatprep.subr.bf16.mxu0 0
  %827 = vmatpush1.bf16.msra.mxu0 %v329
  %828 = vmatprep.subr.bf16.mxu0 0
  %829 = vmatpush1.bf16.msra.mxu0 %v328
  %830 = vmatprep.subr.bf16.mxu0 0
  %831 = vmatpush1.bf16.msra.mxu0 %v327
  %832 = vmatprep.subr.bf16.mxu0 0
  %833 = vmatpush1.bf16.msra.mxu0 %v326
  %834 = vmatprep.subr.bf16.mxu0 0
  %835 = vmatpush1.bf16.msra.mxu0 %v325
  %836 = vmatprep.subr.bf16.mxu0 0
  %837 = vmatpush1.bf16.msra.mxu0 %v324
  %838 = vmatprep.subr.bf16.mxu0 0
  %839 = vmatpush1.bf16.msra.mxu0 %v323
  %840 = vmatprep.subr.bf16.mxu0 0
  %841 = vmatpush2.bf16.msra.mxu0 0
  %842 = vmatprep.subr.bf16.mxu0 0
  %843 = vmatpush2.bf16.msra.mxu0 0
  %844 = vmatprep.subr.bf16.mxu0 0
  %845 = vmatpush2.bf16.msra.mxu0 0
  %846 = vmatprep.subr.bf16.mxu0 0
  %847 = vmatpush2.bf16.msra.mxu0 0
  %848 = vmatprep.subr.bf16.mxu0 0
  %849 = vmatpush2.bf16.msra.mxu0 0
  %850 = vmatprep.subr.bf16.mxu0 0
  %851 = vmatpush2.bf16.msra.mxu0 0
  %852 = vmatprep.subr.bf16.mxu0 0
  %853 = vmatpush2.bf16.msra.mxu0 0
  %854 = vmatprep.subr.bf16.mxu0 0
  %855 = vmatpush2.bf16.msra.mxu0 0
  %856 = vmatprep.mubr.bf16.mxu0 0
  %857 = vmatmul.mubr.bf16.gmra.mxu0 %v823
  %v858 = vpop.f32.mrf.mxu0
  %v859 = vadd.f32 0.0, %v858
  %v860 = vpop.f32.mrf.mxu0
  %v861 = vpop.f32.mrf.mxu0
  %v862 = vpop.f32.mrf.mxu0
  %863 = vdwg.mxu0
  %s864 = scalar_lea.vmem [#allocation2], 80
  %v865 = vld [vmem:[%s864] sm:$0xff]
  %v866 = vadd.f32 %v865, %v818
  %v867 = vtanh.pop %v866
  %v868 = vld [vmem:[%s864 + $0x8] sm:$0xff]
  %v869 = vadd.f32 %v868, %v859
  %v870 = vtanh.pop %v869
  %v871 = vpack.c.bf16 %v867, %v867
  %872 = vmatprep.subr.bf16.mxu0 0
  %873 = vmatpush1.bf16.msra.mxu0 %v330
  %874 = vmatprep.subr.bf16.mxu0 0
  %875 = vmatpush1.bf16.msra.mxu0 %v329
  %876 = vmatprep.subr.bf16.mxu0 0
  %877 = vmatpush1.bf16.msra.mxu0 %v328
  %878 = vmatprep.subr.bf16.mxu0 0
  %879 = vmatpush1.bf16.msra.mxu0 %v327
  %880 = vmatprep.subr.bf16.mxu0 0
  %881 = vmatpush1.bf16.msra.mxu0 %v326
  %882 = vmatprep.subr.bf16.mxu0 0
  %883 = vmatpush1.bf16.msra.mxu0 %v325
  %884 = vmatprep.subr.bf16.mxu0 0
  %885 = vmatpush1.bf16.msra.mxu0 %v324
  %886 = vmatprep.subr.bf16.mxu0 0
  %887 = vmatpush1.bf16.msra.mxu0 %v323
  %888 = vmatprep.subr.bf16.mxu0 0
  %889 = vmatpush2.bf16.msra.mxu0 0
  %890 = vmatprep.subr.bf16.mxu0 0
  %891 = vmatpush2.bf16.msra.mxu0 0
  %892 = vmatprep.subr.bf16.mxu0 0
  %893 = vmatpush2.bf16.msra.mxu0 0
  %894 = vmatprep.subr.bf16.mxu0 0
  %895 = vmatpush2.bf16.msra.mxu0 0
  %896 = vmatprep.subr.bf16.mxu0 0
  %897 = vmatpush2.bf16.msra.mxu0 0
  %898 = vmatprep.subr.bf16.mxu0 0
  %899 = vmatpush2.bf16.msra.mxu0 0
  %900 = vmatprep.subr.bf16.mxu0 0
  %901 = vmatpush2.bf16.msra.mxu0 0
  %902 = vmatprep.subr.bf16.mxu0 0
  %903 = vmatpush2.bf16.msra.mxu0 0
  %904 = vmatprep.mubr.bf16.mxu0 0
  %905 = vmatmul.mubr.bf16.gmra.mxu0 %v871
  %v906 = vpop.f32.mrf.mxu0
  %v907 = vadd.f32 0.0, %v906
  %v908 = vpop.f32.mrf.mxu0
  %v909 = vpop.f32.mrf.mxu0
  %v910 = vpop.f32.mrf.mxu0
  %911 = vdwg.mxu0
  %v912 = vpack.c.bf16 %v870, %v870
  %913 = vmatprep.subr.bf16.mxu0 0
  %914 = vmatpush1.bf16.msra.mxu0 %v330
  %915 = vmatprep.subr.bf16.mxu0 0
  %916 = vmatpush1.bf16.msra.mxu0 %v329
  %917 = vmatprep.subr.bf16.mxu0 0
  %918 = vmatpush1.bf16.msra.mxu0 %v328
  %919 = vmatprep.subr.bf16.mxu0 0
  %920 = vmatpush1.bf16.msra.mxu0 %v327
  %921 = vmatprep.subr.bf16.mxu0 0
  %922 = vmatpush1.bf16.msra.mxu0 %v326
  %923 = vmatprep.subr.bf16.mxu0 0
  %924 = vmatpush1.bf16.msra.mxu0 %v325
  %925 = vmatprep.subr.bf16.mxu0 0
  %926 = vmatpush1.bf16.msra.mxu0 %v324
  %927 = vmatprep.subr.bf16.mxu0 0
  %928 = vmatpush1.bf16.msra.mxu0 %v323
  %929 = vmatprep.subr.bf16.mxu0 0
  %930 = vmatpush2.bf16.msra.mxu0 0
  %931 = vmatprep.subr.bf16.mxu0 0
  %932 = vmatpush2.bf16.msra.mxu0 0
  %933 = vmatprep.subr.bf16.mxu0 0
  %934 = vmatpush2.bf16.msra.mxu0 0
  %935 = vmatprep.subr.bf16.mxu0 0
  %936 = vmatpush2.bf16.msra.mxu0 0
  %937 = vmatprep.subr.bf16.mxu0 0
  %938 = vmatpush2.bf16.msra.mxu0 0
  %939 = vmatprep.subr.bf16.mxu0 0
  %940 = vmatpush2.bf16.msra.mxu0 0
  %941 = vmatprep.subr.bf16.mxu0 0
  %942 = vmatpush2.bf16.msra.mxu0 0
  %943 = vmatprep.subr.bf16.mxu0 0
  %944 = vmatpush2.bf16.msra.mxu0 0
  %945 = vmatprep.mubr.bf16.mxu0 0
  %946 = vmatmul.mubr.bf16.gmra.mxu0 %v912
  %v947 = vpop.f32.mrf.mxu0
  %v948 = vadd.f32 0.0, %v947
  %v949 = vpop.f32.mrf.mxu0
  %v950 = vpop.f32.mrf.mxu0
  %v951 = vpop.f32.mrf.mxu0
  %952 = vdwg.mxu0
  %s953 = scalar_lea.vmem [#allocation2], 96
  %v954 = vld [vmem:[%s953] sm:$0xff]
  %v955 = vadd.f32 %v954, %v907
  %v956 = vtanh.pop %v955
  %v957 = vld [vmem:[%s953 + $0x8] sm:$0xff]
  %v958 = vadd.f32 %v957, %v948
  %v959 = vtanh.pop %v958
  %v960 = vpack.c.bf16 %v956, %v956
  %961 = vmatprep.subr.bf16.mxu0 0
  %962 = vmatpush1.bf16.msra.mxu0 %v330
  %963 = vmatprep.subr.bf16.mxu0 0
  %964 = vmatpush1.bf16.msra.mxu0 %v329
  %965 = vmatprep.subr.bf16.mxu0 0
  %966 = vmatpush1.bf16.msra.mxu0 %v328
  %967 = vmatprep.subr.bf16.mxu0 0
  %968 = vmatpush1.bf16.msra.mxu0 %v327
  %969 = vmatprep.subr.bf16.mxu0 0
  %970 = vmatpush1.bf16.msra.mxu0 %v326
  %971 = vmatprep.subr.bf16.mxu0 0
  %972 = vmatpush1.bf16.msra.mxu0 %v325
  %973 = vmatprep.subr.bf16.mxu0 0
  %974 = vmatpush1.bf16.msra.mxu0 %v324
  %975 = vmatprep.subr.bf16.mxu0 0
  %976 = vmatpush1.bf16.msra.mxu0 %v323
  %977 = vmatprep.subr.bf16.mxu0 0
  %978 = vmatpush2.bf16.msra.mxu0 0
  %979 = vmatprep.subr.bf16.mxu0 0
  %980 = vmatpush2.bf16.msra.mxu0 0
  %981 = vmatprep.subr.bf16.mxu0 0
  %982 = vmatpush2.bf16.msra.mxu0 0
  %983 = vmatprep.subr.bf16.mxu0 0
  %984 = vmatpush2.bf16.msra.mxu0 0
  %985 = vmatprep.subr.bf16.mxu0 0
  %986 = vmatpush2.bf16.msra.mxu0 0
  %987 = vmatprep.subr.bf16.mxu0 0
  %988 = vmatpush2.bf16.msra.mxu0 0
  %989 = vmatprep.subr.bf16.mxu0 0
  %990 = vmatpush2.bf16.msra.mxu0 0
  %991 = vmatprep.subr.bf16.mxu0 0
  %992 = vmatpush2.bf16.msra.mxu0 0
  %993 = vmatprep.mubr.bf16.mxu0 0
  %994 = vmatmul.mubr.bf16.gmra.mxu0 %v960
  %v995 = vpop.f32.mrf.mxu0
  %v996 = vadd.f32 0.0, %v995
  %v997 = vpop.f32.mrf.mxu0
  %v998 = vpop.f32.mrf.mxu0
  %v999 = vpop.f32.mrf.mxu0
  %1000 = vdwg.mxu0
  %v1001 = vpack.c.bf16 %v959, %v959
  %1002 = vmatprep.subr.bf16.mxu0 0
  %1003 = vmatpush1.bf16.msra.mxu0 %v330
  %1004 = vmatprep.subr.bf16.mxu0 0
  %1005 = vmatpush1.bf16.msra.mxu0 %v329
  %1006 = vmatprep.subr.bf16.mxu0 0
  %1007 = vmatpush1.bf16.msra.mxu0 %v328
  %1008 = vmatprep.subr.bf16.mxu0 0
  %1009 = vmatpush1.bf16.msra.mxu0 %v327
  %1010 = vmatprep.subr.bf16.mxu0 0
  %1011 = vmatpush1.bf16.msra.mxu0 %v326
  %1012 = vmatprep.subr.bf16.mxu0 0
  %1013 = vmatpush1.bf16.msra.mxu0 %v325
  %1014 = vmatprep.subr.bf16.mxu0 0
  %1015 = vmatpush1.bf16.msra.mxu0 %v324
  %1016 = vmatprep.subr.bf16.mxu0 0
  %1017 = vmatpush1.bf16.msra.mxu0 %v323
  %1018 = vmatprep.subr.bf16.mxu0 0
  %1019 = vmatpush2.bf16.msra.mxu0 0
  %1020 = vmatprep.subr.bf16.mxu0 0
  %1021 = vmatpush2.bf16.msra.mxu0 0
  %1022 = vmatprep.subr.bf16.mxu0 0
  %1023 = vmatpush2.bf16.msra.mxu0 0
  %1024 = vmatprep.subr.bf16.mxu0 0
  %1025 = vmatpush2.bf16.msra.mxu0 0
  %1026 = vmatprep.subr.bf16.mxu0 0
  %1027 = vmatpush2.bf16.msra.mxu0 0
  %1028 = vmatprep.subr.bf16.mxu0 0
  %1029 = vmatpush2.bf16.msra.mxu0 0
  %1030 = vmatprep.subr.bf16.mxu0 0
  %1031 = vmatpush2.bf16.msra.mxu0 0
  %1032 = vmatprep.subr.bf16.mxu0 0
  %1033 = vmatpush2.bf16.msra.mxu0 0
  %1034 = vmatprep.mubr.bf16.mxu0 0
  %1035 = vmatmul.mubr.bf16.gmra.mxu0 %v1001
  %v1036 = vpop.f32.mrf.mxu0
  %v1037 = vadd.f32 0.0, %v1036
  %v1038 = vpop.f32.mrf.mxu0
  %v1039 = vpop.f32.mrf.mxu0
  %v1040 = vpop.f32.mrf.mxu0
  %1041 = vdwg.mxu0
  %s1042 = scalar_lea.vmem [#allocation2], 112
  %v1043 = vld [vmem:[%s1042] sm:$0xff]
  %v1044 = vadd.f32 %v1043, %v996
  %v1045 = vtanh.pop %v1044
  %v1046 = vld [vmem:[%s1042 + $0x8] sm:$0xff]
  %v1047 = vadd.f32 %v1046, %v1037
  %v1048 = vtanh.pop %v1047
  %1049 = vst [vmem:[#allocation3] sm:$0xff] %v1045
  %1050 = vst [vmem:[#allocation3 + $0x8] sm:$0xff] %v1048
  // Predicated region
  $region22: #{rnn_forward.1} parent=0 // pred_check
    %p1051 = pneg %p18
  $region23: #{rnn_forward.1} parent=0 // pred_check_branch
    %1053 = sbr.rel (%p1051) target = $region25
  $region24: #{rnn_forward.1} parent=0 // pred_region
    %v1054 = vld [vmem:[#allocation3] sm:$0xff]
    %v1055 = vld [vmem:[#allocation3 + $0x8] sm:$0xff]
    %1056 = vst [vmem:[%s4] sm:$0xff] %v1054
    %1057 = vst [vmem:[%s4 + $0x8] sm:$0xff] %v1055
  $region25: #{rnn_forward.1} parent=0 // pred_fallthru
    _
  // Predicated region
  $region26: #{rnn_forward.1} parent=0 // pred_check
    _
  $region27: #{rnn_forward.1} parent=0 // pred_check_branch
    %1059 = sbr.rel (0) target = $region29
  $region28: #{rnn_forward.1} parent=0 // pred_region
    _
  $region29: #{rnn_forward.1} parent=0 // pred_fallthru
    _
  // Predicated region
  $region30: #{rnn_forward.1} parent=0 // pred_check
    _
  $region31: #{rnn_forward.1} parent=0 // pred_check_branch
    %1061 = sbr.rel (0) target = $region33
  $region32: #{rnn_forward.1} parent=0 // pred_region
    _
  $region33: #{rnn_forward.1} parent=0 // pred_fallthru
    _

</llo_original>
